<compile_context>
chip_gen: v6e
topology: v6e:2x2x1
jax: 0.10.0
libtpu: 0.0.40
codegen_flags: <defaults>
</compile_context>

<pallas_src>
import functools

import jax
import jax.numpy as jnp
from jax import lax
from jax.experimental import pallas as pl
from jax.experimental.pallas import tpu as pltpu

LANES = 128
SLAB_ROWS = 512          # inner fold granularity: 512*128*4B = 256 KiB per f32 slab
MAX_TILE_ROWS = 8192     # 4 MiB per f32 input block per grid step
ACC_ROWS = 32            # widened resident partial accumulator (32,128)


def _pairwise_l1(x, y):
    # |sigmoid(x) - sigmoid(y)| == 0.5 * |tanh(x/2) - tanh(y/2)|
    # -> one EUP tanh per operand instead of exp + reciprocal per sigmoid.
    return 0.5 * jnp.abs(jnp.tanh(0.5 * x) - jnp.tanh(0.5 * y))


def _l1_loss_kernel(p_ref, t_ref, num_ref, den_ref, *,
                    thr, n_valid, tile_rows, blocks_per_slice, num_blocks,
                    mask_needed):
    p_idx = pl.program_id(0)
    k_idx = pl.program_id(1)
    block = p_idx * blocks_per_slice + k_idx   # logical block index

    @pl.when(k_idx == 0)
    def _():
        num_ref[...] = jnp.zeros_like(num_ref)
        den_ref[...] = jnp.zeros_like(den_ref)

    slab = min(SLAB_ROWS, tile_rows)
    n_full = tile_rows // slab
    rem = tile_rows - n_full * slab            # always a multiple of 8

    def accumulate(start, nrows, masked):
        # Load one slab in native dtype and upcast in registers.
        x = p_ref[pl.ds(start, nrows), :].astype(jnp.float32)
        y = t_ref[pl.ds(start, nrows), :].astype(jnp.float32)
        l1 = _pairwise_l1(x, y)
        sel = l1 > thr
        if masked:
            # Only compiled/executed for the final logical block: zero out
            # wrapper zero-padding and Pallas edge-block garbage, for any
            # threshold sign.
            row = lax.broadcasted_iota(jnp.int32, (nrows, LANES), 0)
            col = lax.broadcasted_iota(jnp.int32, (nrows, LANES), 1)
            grow = block * tile_rows + start + row
            full_rows = n_valid // LANES
            rem_cols = n_valid % LANES
            valid = (grow < full_rows) | ((grow == full_rows) & (col < rem_cols))
            sel = valid & sel
        wl1 = jnp.where(sel, l1, 0.0)
        w = jnp.where(sel, 1.0, 0.0)

        # Pure-VPU fold of (nrows, LANES) into the resident accumulators.
        # Reshapes split the sublane axis on 8/32-row boundaries (layout-free);
        # the expensive cross-lane reduce happens once, in the wrapper.
        if nrows % ACC_ROWS == 0:
            num_ref[...] += wl1.reshape(nrows // ACC_ROWS, ACC_ROWS, LANES).sum(axis=0)
            den_ref[...] += w.reshape(nrows // ACC_ROWS, ACC_ROWS, LANES).sum(axis=0)
        else:
            num_ref[0:8, :] += wl1.reshape(nrows // 8, 8, LANES).sum(axis=0)
            den_ref[0:8, :] += w.reshape(nrows // 8, 8, LANES).sum(axis=0)

    def run_tile(masked):
        if n_full > 1:
            @pl.loop(0, n_full)
            def _(i):
                accumulate(pl.multiple_of(i * slab, slab), slab, masked)
        elif n_full == 1:
            accumulate(0, slab, masked)
        if rem > 0:
            accumulate(n_full * slab, rem, masked)

    if mask_needed:
        # Blocks strictly before the last contain only valid data (fast path);
        # the last logical block may contain padding / edge garbage (masked);
        # clamped duplicate tail blocks (block > num_blocks-1) contribute nothing.
        @pl.when(block < num_blocks - 1)
        def _():
            run_tile(masked=False)

        @pl.when(block == num_blocks - 1)
        def _():
            run_tile(masked=True)
    else:
        run_tile(masked=False)


def l1_loss_pallas(preds, targets_, *, scale=1.0, l1_loss_thr=0.05,
                   loss_name="l1_loss"):
    """Pallas implementation of L1Loss.forward. Returns {loss_name: scalar}."""
    assert preds.shape == targets_.shape
    n = int(preds.size)

    flat_p = preds.reshape(-1)   # native dtype; no upcast copy in HBM
    flat_t = targets_.reshape(-1)

    # dtype-aware sublane packing: f32 -> 8 rows, bf16/f16 -> 16, int8/fp8 -> 32
    itemsize = max(1, min(4, jnp.dtype(preds.dtype).itemsize))
    sub = 8 * (4 // itemsize)
    row_block = sub * LANES
    n_pad = pl.cdiv(n, row_block) * row_block
    if n_pad != n:
        # Minimal padding only (whole-array copy only when numel isn't already
        # a multiple of sub*128); the padded tail is excluded in-kernel.
        flat_p = jnp.pad(flat_p, (0, n_pad - n))
        flat_t = jnp.pad(flat_t, (0, n_pad - n))

    rows = n_pad // LANES                       # multiple of `sub`
    p2d = flat_p.reshape(rows, LANES)
    t2d = flat_t.reshape(rows, LANES)

    tile_rows = min(MAX_TILE_ROWS, rows)        # multiple of `sub`
    num_blocks = pl.cdiv(rows, tile_rows)
    num_slices = 2 if num_blocks >= 2 else 1    # one slice per v7x TensorCore
    blocks_per_slice = pl.cdiv(num_blocks, num_slices)

    thr = float(l1_loss_thr)
    # Masking is only needed when a block can contain data that must not
    # contribute: a partial Pallas edge block, a clamped duplicate tail block,
    # or zero padding combined with a negative threshold (zero padding gives
    # l1 == 0, which self-masks whenever thr >= 0).
    mask_needed = (rows % tile_rows != 0) or (num_blocks % num_slices != 0) \
        or (n != n_pad and thr < 0.0)

    def in_index(p, k):
        # Clamp so duplicated tail steps stay in bounds; the kernel skips them.
        return (jnp.minimum(p * blocks_per_slice + k, num_blocks - 1), 0)

    kernel = functools.partial(
        _l1_loss_kernel, thr=thr, n_valid=n, tile_rows=tile_rows,
        blocks_per_slice=blocks_per_slice, num_blocks=num_blocks,
        mask_needed=mask_needed)

    num_p, den_p = pl.pallas_call(
        kernel,
        out_shape=(
            jax.ShapeDtypeStruct((ACC_ROWS * num_slices, LANES), jnp.float32),
            jax.ShapeDtypeStruct((ACC_ROWS * num_slices, LANES), jnp.float32),
        ),
        grid_spec=pltpu.PrefetchScalarGridSpec(
            num_scalar_prefetch=0,
            grid=(num_slices, blocks_per_slice),
            in_specs=[
                pl.BlockSpec((tile_rows, LANES), in_index),
                pl.BlockSpec((tile_rows, LANES), in_index),
            ],
            out_specs=(
                pl.BlockSpec((ACC_ROWS, LANES), lambda p, k: (p, 0)),
                pl.BlockSpec((ACC_ROWS, LANES), lambda p, k: (p, 0)),
            ),
        ),
        compiler_params=pltpu.CompilerParams(
            dimension_semantics=("parallel", "arbitrary"),
            # 2 inputs x 2 pipeline buffers x 4 MiB = 16 MiB of input buffers
            # (+ ~2-3 MiB of slab temporaries): raise v5e's 16 MiB default.
            vmem_limit_bytes=32 * 1024 * 1024),
    )(p2d, t2d)

    num = jnp.sum(num_p)
    den = jnp.sum(den_p)
    loss = num / (den + 1.0) * scale
    return {loss_name: loss}


def l1_loss_reference(preds, targets_, *, scale=1.0, l1_loss_thr=0.05,
                      loss_name="l1_loss"):
    probs = jax.nn.sigmoid(preds.astype(jnp.float32))
    targets = jax.nn.sigmoid(targets_.astype(jnp.float32))
    l1 = jnp.abs(probs - targets)
    w = (l1 > l1_loss_thr).astype(jnp.float32)
    return {loss_name: (w * l1).sum() / (w.sum() + 1.0) * scale}


def _check(p, t, *, scale, thr):
    out = l1_loss_pallas(p, t, scale=scale, l1_loss_thr=thr)
    loss = jax.block_until_ready(out["l1_loss"])
    ref = l1_loss_reference(p, t, scale=scale, l1_loss_thr=thr)["l1_loss"]
    assert jnp.allclose(loss, ref, rtol=5e-4, atol=1e-6), (thr, loss, ref)


if __name__ == "__main__":
    key = jax.random.PRNGKey(0)
    k1, k2, k3, k4, k5, k6, k7, k8 = jax.random.split(key, 8)

    # shapes consistent with a segmentation logits map: N=2, C=4, H=W=16
    preds = jax.random.normal(k1, (2, 4, 16, 16), dtype=jnp.float32)
    targets_ = jax.random.normal(k2, (2, 4, 16, 16), dtype=jnp.float32)
    _check(preds, targets_, scale=1.0, thr=0.05)

    # non-aligned numel + negative threshold -> exercises in-kernel masking
    p2 = jax.random.normal(k3, (2, 3, 15, 17), dtype=jnp.float32)
    t2 = jax.random.normal(k4, (2, 3, 15, 17), dtype=jnp.float32)
    _check(p2, t2, scale=2.0, thr=-0.1)

    # medium shape: exercises the in-kernel slab loop + remainder slab,
    # with both the unmasked (thr>=0) and masked (thr<0) code paths
    p3 = jax.random.normal(k5, (2, 3, 152, 200), dtype=jnp.float32)
    t3 = jax.random.normal(k6, (2, 3, 152, 200), dtype=jnp.float32)
    _check(p3, t3, scale=1.0, thr=0.05)
    _check(p3, t3, scale=0.5, thr=-0.1)

    # larger shape: exercises the multi-block grid, the two-slice "parallel"
    # axis, and a partial (edge) final block
    p4 = jax.random.normal(k7, (4, 4, 256, 320), dtype=jnp.float32)
    t4 = jax.random.normal(k8, (4, 4, 256, 320), dtype=jnp.float32)
    _check(p4, t4, scale=1.0, thr=0.05)

    print("KERNEL_OK")
</pallas_src>

<mosaic_0001>
module attributes {stable_mosaic.version = 11 : i64} {
  func.func @_l1_loss_kernel(%arg0: i32, %arg1: i32, %arg2: memref<16x128xf32, #tpu.memory_space<vmem>>, %arg3: memref<16x128xf32, #tpu.memory_space<vmem>>, %arg4: memref<32x128xf32, #tpu.memory_space<vmem>>, %arg5: memref<32x128xf32, #tpu.memory_space<vmem>>) attributes {dimension_semantics = [#tpu.dimension_semantics<parallel>, #tpu.dimension_semantics<arbitrary>], iteration_bounds = array<i64: 1, 1>, scalar_prefetch = 0 : i64, scratch_operands = 0 : i64, tpu.core_type = #tpu.core_type<tc>, window_params = [{transform_indices = @transform_0, window_bounds = array<i64: 16, 128>}, {transform_indices = @transform_1, window_bounds = array<i64: 16, 128>}, {transform_indices = @transform_2, window_bounds = array<i64: 32, 128>}, {transform_indices = @transform_3, window_bounds = array<i64: 32, 128>}]} {
    %c0_i32 = arith.constant 0 : i32
    %0 = arith.cmpi eq, %arg1, %c0_i32 : i32
    %1 = arith.extui %0 : i1 to i32
    %c0_i32_0 = arith.constant 0 : i32
    %2 = arith.cmpi ne, %1, %c0_i32_0 : i32
    scf.if %2 {
      %cst_20 = arith.constant 0.000000e+00 : f32
      %32 = vector.broadcast %cst_20 : f32 to vector<32x128xf32>
      %c0_21 = arith.constant 0 : index
      %c0_22 = arith.constant 0 : index
      %33 = vector.load %arg4[%c0_21, %c0_22] : memref<32x128xf32, #tpu.memory_space<vmem>>, vector<32x128xf32>
      tpu.vector_store %arg4[%c0_21, %c0_22], %32 {strides = array<i32>} : memref<32x128xf32, #tpu.memory_space<vmem>>, vector<32x128xf32>,
      %cst_23 = arith.constant 0.000000e+00 : f32
      %34 = vector.broadcast %cst_23 : f32 to vector<32x128xf32>
      %c0_24 = arith.constant 0 : index
      %c0_25 = arith.constant 0 : index
      %35 = vector.load %arg5[%c0_24, %c0_25] : memref<32x128xf32, #tpu.memory_space<vmem>>, vector<32x128xf32>
      tpu.vector_store %arg5[%c0_24, %c0_25], %34 {strides = array<i32>} : memref<32x128xf32, #tpu.memory_space<vmem>>, vector<32x128xf32>,
    } else {
    }
    %c0 = arith.constant 0 : index
    %c0_1 = arith.constant 0 : index
    %3 = vector.load %arg2[%c0, %c0_1] : memref<16x128xf32, #tpu.memory_space<vmem>>, vector<16x128xf32>
    %c0_2 = arith.constant 0 : index
    %c0_3 = arith.constant 0 : index
    %4 = vector.load %arg3[%c0_2, %c0_3] : memref<16x128xf32, #tpu.memory_space<vmem>>, vector<16x128xf32>
    %cst = arith.constant 5.000000e-01 : f32
    %5 = vector.broadcast %cst : f32 to vector<16x128xf32>
    %6 = arith.mulf %5, %3 : vector<16x128xf32>
    %7 = math.tanh %6 : vector<16x128xf32>
    %cst_4 = arith.constant 5.000000e-01 : f32
    %8 = vector.broadcast %cst_4 : f32 to vector<16x128xf32>
    %9 = arith.mulf %8, %4 : vector<16x128xf32>
    %10 = math.tanh %9 : vector<16x128xf32>
    %11 = arith.subf %7, %10 : vector<16x128xf32>
    %12 = math.absf %11 : vector<16x128xf32>
    %cst_5 = arith.constant 5.000000e-01 : f32
    %13 = vector.broadcast %cst_5 : f32 to vector<16x128xf32>
    %14 = arith.mulf %13, %12 : vector<16x128xf32>
    %cst_6 = arith.constant 5.000000e-02 : f32
    %15 = vector.broadcast %cst_6 : f32 to vector<16x128xf32>
    %16 = arith.cmpf ogt, %14, %15 : vector<16x128xf32>
    %cst_7 = arith.constant 0.000000e+00 : f32
    %17 = vector.broadcast %cst_7 : f32 to vector<16x128xf32>
    %18 = arith.select %16, %14, %17 : vector<16x128xi1>, vector<16x128xf32>
    %cst_8 = arith.constant 1.000000e+00 : f32
    %cst_9 = arith.constant 0.000000e+00 : f32
    %19 = vector.broadcast %cst_8 : f32 to vector<16x128xf32>
    %20 = vector.broadcast %cst_9 : f32 to vector<16x128xf32>
    %21 = arith.select %16, %19, %20 : vector<16x128xi1>, vector<16x128xf32>
    %c0_10 = arith.constant 0 : index
    %c0_11 = arith.constant 0 : index
    %22 = vector.load %arg4[%c0_10, %c0_11] : memref<32x128xf32, #tpu.memory_space<vmem>>, vector<8x128xf32>
    %23 = vector.shape_cast %18 : vector<16x128xf32> to vector<2x8x128xf32>
    %cst_12 = arith.constant dense<0.000000e+00> : vector<8x128xf32>
    %24 = vector.multi_reduction <add>, %23, %cst_12 [0] : vector<2x8x128xf32> to vector<8x128xf32>
    %25 = arith.addf %22, %24 : vector<8x128xf32>
    %c0_13 = arith.constant 0 : index
    %c0_14 = arith.constant 0 : index
    %26 = vector.load %arg4[%c0_13, %c0_14] : memref<32x128xf32, #tpu.memory_space<vmem>>, vector<8x128xf32>
    tpu.vector_store %arg4[%c0_13, %c0_14], %25 {strides = array<i32>} : memref<32x128xf32, #tpu.memory_space<vmem>>, vector<8x128xf32>,
    %c0_15 = arith.constant 0 : index
    %c0_16 = arith.constant 0 : index
    %27 = vector.load %arg5[%c0_15, %c0_16] : memref<32x128xf32, #tpu.memory_space<vmem>>, vector<8x128xf32>
    %28 = vector.shape_cast %21 : vector<16x128xf32> to vector<2x8x128xf32>
    %cst_17 = arith.constant dense<0.000000e+00> : vector<8x128xf32>
    %29 = vector.multi_reduction <add>, %28, %cst_17 [0] : vector<2x8x128xf32> to vector<8x128xf32>
    %30 = arith.addf %27, %29 : vector<8x128xf32>
    %c0_18 = arith.constant 0 : index
    %c0_19 = arith.constant 0 : index
    %31 = vector.load %arg5[%c0_18, %c0_19] : memref<32x128xf32, #tpu.memory_space<vmem>>, vector<8x128xf32>
    tpu.vector_store %arg5[%c0_18, %c0_19], %30 {strides = array<i32>} : memref<32x128xf32, #tpu.memory_space<vmem>>, vector<8x128xf32>,
    return
  }
  func.func @transform_0(%arg0: i32, %arg1: i32) -> (i32, i32) {
    %c1_i32 = arith.constant 1 : i32
    %0 = arith.muli %arg0, %c1_i32 : i32
    %1 = arith.addi %0, %arg1 : i32
    %c0_i32 = arith.constant 0 : i32
    %2 = arith.minsi %1, %c0_i32 : i32
    %c0_i32_0 = arith.constant 0 : i32
    %c0_i32_1 = arith.constant 0 : i32
    return %2, %c0_i32_0 : i32, i32
  }
  func.func @transform_1(%arg0: i32, %arg1: i32) -> (i32, i32) {
    %c1_i32 = arith.constant 1 : i32
    %0 = arith.muli %arg0, %c1_i32 : i32
    %1 = arith.addi %0, %arg1 : i32
    %c0_i32 = arith.constant 0 : i32
    %2 = arith.minsi %1, %c0_i32 : i32
    %c0_i32_0 = arith.constant 0 : i32
    %c0_i32_1 = arith.constant 0 : i32
    return %2, %c0_i32_0 : i32, i32
  }
  func.func @transform_2(%arg0: i32, %arg1: i32) -> (i32, i32) {
    %c0_i32 = arith.constant 0 : i32
    %c0_i32_0 = arith.constant 0 : i32
    return %arg0, %c0_i32 : i32, i32
  }
  func.func @transform_3(%arg0: i32, %arg1: i32) -> (i32, i32) {
    %c0_i32 = arith.constant 0 : i32
    %c0_i32_0 = arith.constant 0 : i32
    return %arg0, %c0_i32 : i32, i32
  }
}

</mosaic_0001>

<llo_original>
// kernel: tpu_custom_call.1
$region0: #{tpu_custom_call.1}
  #allocation0 [shape = 'u32[]', space=smem, size = 0x4, offset = 0x4, fixed_abs, tag = 'smem constant byte address 0x4 - core index']
  #allocation1 [shape = 'u32[144,128]{1,0:T(1,128)}', space=vmem, size = 0x12000, scoped, tag = 'internal scratch']
  %s0 = inlined_call_operand.hbm [shape: f32[16,128], index: 0, kind: input, shape index: {}]
  %s1 = inlined_call_operand.hbm [shape: f32[16,128], index: 1, kind: input, shape index: {}]
  %s2 = inlined_call_operand.hbm [shape: f32[32,128], index: 2, kind: output, shape index: {0}]
  %s3 = inlined_call_operand.hbm [shape: f32[32,128], index: 3, kind: output, shape index: {1}]
  %4 = xla_tuple %s2, %s3
  %s5 = sld [smem:[#allocation0]]
  $region38: #{tpu_custom_call.1} parent=0
    _
  %s7 = ssub.s32 1, %s5
  %s8 = scalar_select 0, %s7, %s5
  $region1: #{tpu_custom_call.1} parent=0
    #allocation2 [shape = 'u8[8192]{0}', space=vmem, size = 0x2000, scoped, tag = 'input window, operand 0, single buffered']
    #allocation3 [shape = 's32[1]{0}', space=sflag, size = 0x4, scoped, tag = 'scoped memory for tpu_custom_call.1']
    #allocation4 [shape = 's32[1]{0}', space=sflag, size = 0x4, scoped, tag = 'scoped memory for tpu_custom_call.1']
    #allocation5 [shape = 'u8[8192]{0}', space=vmem, size = 0x2000, scoped, tag = 'input window, operand 1, single buffered']
    #allocation6 [shape = 's32[1]{0}', space=sflag, size = 0x4, scoped, tag = 'scoped memory for tpu_custom_call.1']
    #allocation7 [shape = 'u8[16384]{0}', space=vmem, size = 0x4000, scoped, tag = 'output window, operand 0, single buffered']
    #allocation8 [shape = 'u8[16384]{0}', space=vmem, size = 0x4000, scoped, tag = 'output window, operand 1, single buffered']
    #allocation9 [shape = 's32[1]{0}', space=sflag, size = 0x4, scoped, tag = 'scoped memory for tpu_custom_call.1']
    %9 = vsyncpa [#allocation3], 0
    %10 = vsyncpa [#allocation6], 0
    %11 = vsyncpa [#allocation4], 0
    %12 = vsyncpa [#allocation9], 0
    // Predicated region
    $region2: #{tpu_custom_call.1} parent=1 // pred_check
      _
    $region3: #{tpu_custom_call.1} parent=1 // pred_check_branch
      %14 = sbr.rel (0) target = $region5
    $region4: #{tpu_custom_call.1} parent=1 // pred_region
      %s15 = sadd.s32 0, 0
      %p16 = scmp.lt.s32.totalorder %s15, 0
      %s17 = scalar_select %p16, %s15, 0
      %s18 = smul.u32 2, %s17
      %s20 = ssub.s32 256, 256
      %21 = vsyncadd [#allocation3], %s20
      %s22 = smul.addr %s18, 128
      %s23 = scalar_lea.hbm %s0, %s22
      %s24 = sshll.u32 [#allocation2], 4
      %s25 = int_to_ptr.vmem [resolvable:$true] %s24
      %30 = dma.hbm_to_vmem [thread:$0]  %s23, 256, %s25, [#allocation3], 128, 128, 8
    $region5: #{tpu_custom_call.1} parent=1 // pred_fallthru
      _
    // Predicated region
    $region6: #{tpu_custom_call.1} parent=1 // pred_check
      _
    $region7: #{tpu_custom_call.1} parent=1 // pred_check_branch
      %32 = sbr.rel (0) target = $region9
    $region8: #{tpu_custom_call.1} parent=1 // pred_region
      %s33 = sadd.s32 0, 0
      %p34 = scmp.lt.s32.totalorder %s33, 0
      %s35 = scalar_select %p34, %s33, 0
      %s36 = smul.u32 2, %s35
      %s38 = ssub.s32 256, 256
      %39 = vsyncadd [#allocation6], %s38
      %s40 = smul.addr %s36, 128
      %s41 = scalar_lea.hbm %s1, %s40
      %s42 = sshll.u32 [#allocation5], 4
      %s43 = int_to_ptr.vmem [resolvable:$true] %s42
      %48 = dma.hbm_to_vmem [thread:$0]  %s41, 256, %s43, [#allocation6], 128, 128, 8
    $region9: #{tpu_custom_call.1} parent=1 // pred_fallthru
      _
    // Predicated region
    $region10: #{tpu_custom_call.1} parent=1 // pred_check
      _
    $region11: #{tpu_custom_call.1} parent=1 // pred_check_branch
      %50 = sbr.rel (0) target = $region13
    $region12: #{tpu_custom_call.1} parent=1 // pred_region
      %51 = dma.done [#allocation3], 256
    $region13: #{tpu_custom_call.1} parent=1 // pred_fallthru
      _
    // Predicated region
    $region14: #{tpu_custom_call.1} parent=1 // pred_check
      _
    $region15: #{tpu_custom_call.1} parent=1 // pred_check_branch
      %53 = sbr.rel (0) target = $region17
    $region16: #{tpu_custom_call.1} parent=1 // pred_region
      %54 = dma.done [#allocation6], 256
    $region17: #{tpu_custom_call.1} parent=1 // pred_fallthru
      _
    %s55 = sadd.s32 0, 0
    %p56 = scmp.lt.s32.totalorder %s55, 0
    %s57 = scalar_select %p56, %s55, 0
    %s58 = smul.u32 2, %s57
    %s59 = sadd.s32 0, 0
    %p60 = scmp.lt.s32.totalorder %s59, 0
    %s61 = scalar_select %p60, %s59, 0
    %s62 = smul.u32 2, %s61
    %p63 = scmp.eq.s32.totalorder 0, 0
    // Predicated region
    $region18: #{tpu_custom_call.1} parent=1 // pred_check
      %p64 = pneg %p63
    $region19: #{tpu_custom_call.1} parent=1 // pred_check_branch
      %66 = sbr.rel (%p64) target = $region21
    $region20: #{tpu_custom_call.1} parent=1 // pred_region
      %67 = vst [vmem:[#allocation7] sm:$0xff] 0.0
      %68 = vst [vmem:[#allocation7 + $0x8] sm:$0xff] 0.0
      %69 = vst [vmem:[#allocation7 + $0x10] sm:$0xff] 0.0
      %70 = vst [vmem:[#allocation7 + $0x18] sm:$0xff] 0.0
      %71 = vst [vmem:[#allocation8] sm:$0xff] 0.0
      %72 = vst [vmem:[#allocation8 + $0x8] sm:$0xff] 0.0
      %73 = vst [vmem:[#allocation8 + $0x10] sm:$0xff] 0.0
      %74 = vst [vmem:[#allocation8 + $0x18] sm:$0xff] 0.0
    $region21: #{tpu_custom_call.1} parent=1 // pred_fallthru
      _
    %v75 = vld [vmem:[#allocation2] sm:$0xff]
    %v76 = vld [vmem:[#allocation2 + $0x8] sm:$0xff]
    %v77 = vld [vmem:[#allocation5] sm:$0xff]
    %v78 = vld [vmem:[#allocation5 + $0x8] sm:$0xff]
    %v79 = vmul.f32 %v75, 0.5
    %v80 = vmul.f32 %v76, 0.5
    %v81 = vtanh.pop %v79
    %v82 = vtanh.pop %v80
    %v83 = vmul.f32 %v77, 0.5
    %v84 = vmul.f32 %v78, 0.5
    %v85 = vtanh.pop %v83
    %v86 = vtanh.pop %v84
    %v87 = vsub.f32 %v81, %v85
    %v88 = vsub.f32 %v82, %v86
    %v89 = vand.u32 2147483647, %v87
    %v90 = vand.u32 2147483647, %v88
    %v91 = vmul.f32 %v89, 0.5
    %v92 = vmul.f32 %v90, 0.5
    %vm93 = vcmp.gt.f32.partialorder %v91, 0.05
    %vm94 = vcmp.gt.f32.partialorder %v92, 0.05
    %v95 = vsel %vm93, %v91, 0.0
    %v96 = vsel %vm94, %v92, 0.0
    %v97 = vsel %vm93, 1.0, 0.0
    %v98 = vsel %vm94, 1.0, 0.0
    %v99 = vld [vmem:[#allocation7] sm:$0xff]
    %v100 = vadd.f32 %v95, %v96
    %v101 = vadd.f32 %v99, %v100
    %102 = vst [vmem:[#allocation7] sm:$0xff] %v101
    %v103 = vld [vmem:[#allocation8] sm:$0xff]
    %v104 = vadd.f32 %v97, %v98
    %v105 = vadd.f32 %v103, %v104
    %106 = vst [vmem:[#allocation8] sm:$0xff] %v105
    // Predicated region
    $region22: #{tpu_custom_call.1} parent=1 // pred_check
      _
    $region23: #{tpu_custom_call.1} parent=1 // pred_check_branch
      %108 = sbr.rel (0) target = $region25
    $region24: #{tpu_custom_call.1} parent=1 // pred_region
      %s110 = ssub.s32 512, 512
      %111 = vsyncadd [#allocation4], %s110
      %s112 = sshll.u32 [#allocation7], 4
      %s113 = int_to_ptr.vmem [resolvable:$true] %s112
      %118 = dma.vmem_to_hbm [thread:$0]  %s113, 512, %s2, [#allocation4], 128, 128, 8
    $region25: #{tpu_custom_call.1} parent=1 // pred_fallthru
      _
    // Predicated region
    $region26: #{tpu_custom_call.1} parent=1 // pred_check
      _
    $region27: #{tpu_custom_call.1} parent=1 // pred_check_branch
      %120 = sbr.rel (0) target = $region29
    $region28: #{tpu_custom_call.1} parent=1 // pred_region
      %s122 = ssub.s32 512, 512
      %123 = vsyncadd [#allocation9], %s122
      %s124 = sshll.u32 [#allocation8], 4
      %s125 = int_to_ptr.vmem [resolvable:$true] %s124
      %130 = dma.vmem_to_hbm [thread:$0]  %s125, 512, %s3, [#allocation9], 128, 128, 8
    $region29: #{tpu_custom_call.1} parent=1 // pred_fallthru
      _
    // Predicated region
    $region30: #{tpu_custom_call.1} parent=1 // pred_check
      _
    $region31: #{tpu_custom_call.1} parent=1 // pred_check_branch
      %132 = sbr.rel (0) target = $region33
    $region32: #{tpu_custom_call.1} parent=1 // pred_region
      %133 = dma.done [#allocation4], 512
    $region33: #{tpu_custom_call.1} parent=1 // pred_fallthru
      _
    // Predicated region
    $region34: #{tpu_custom_call.1} parent=1 // pred_check
      _
    $region35: #{tpu_custom_call.1} parent=1 // pred_check_branch
      %135 = sbr.rel (0) target = $region37
    $region36: #{tpu_custom_call.1} parent=1 // pred_region
      %136 = dma.done [#allocation9], 512
    $region37: #{tpu_custom_call.1} parent=1 // pred_fallthru
      _
    %137 = vsyncpa [#allocation3], 1
    %138 = vsyncpa [#allocation6], 1
    %139 = vsyncpa [#allocation4], 1
    %140 = vsyncpa [#allocation9], 1

</llo_original>
